<compile_context>
chip_gen: v7x
topology: tpu7x:2x2x1
jax: 0.10.0
libtpu: 0.0.40
codegen_flags: <defaults>
</compile_context>

<pallas_src>
import functools

import jax
import jax.numpy as jnp
from jax import lax
from jax.experimental import pallas as pl
from jax.experimental.pallas import tpu as pltpu


def fused_heads_kernel(hs_ref, w_ref, b_ref, o_ref, *,
                       hidden, num_entity, num_intent):
    """One row-tile: packed matmul + bias + masked NER log_softmax.

    hs_ref : (4, TM, H)    last-4 BERT hidden-state row tiles (bf16)
    w_ref  : (4H, N_pad)   packed weights (rows k*H:(k+1)*H belong to layer k;
                           cols [0,NE)=NER head, [NE,NE+NI)=intent head, rest 0)
    b_ref  : (1, N_pad)    packed bias (f32)
    o_ref  : (TM, N_pad)   lane-dense packed output:
                           [0,NE) NER log-probs, [NE,NE+NI) raw intent logits
    """
    h = hidden
    # Equivalent to concat-along-features followed by one K=4H matmul, but the
    # concat never exists: 4 accumulating MXU matmuls, each streaming one
    # (H, N_pad) weight panel straight from VMEM (bf16 in, f32 accumulation).
    logits = jnp.dot(hs_ref[0], w_ref[0 * h:1 * h, :],
                     preferred_element_type=jnp.float32)
    logits = logits + jnp.dot(hs_ref[1], w_ref[1 * h:2 * h, :],
                              preferred_element_type=jnp.float32)
    logits = logits + jnp.dot(hs_ref[2], w_ref[2 * h:3 * h, :],
                              preferred_element_type=jnp.float32)
    logits = logits + jnp.dot(hs_ref[3], w_ref[3 * h:4 * h, :],
                              preferred_element_type=jnp.float32)
    logits = logits + b_ref[...]                       # (TM, Npad) + (1, Npad)

    # Column masks for the packed heads / padding.
    col = lax.broadcasted_iota(jnp.int32, logits.shape, 1)
    ner_mask = col < num_entity
    int_mask = jnp.logical_and(col >= num_entity, col < num_entity + num_intent)

    # Numerically-stable log-sum-exp restricted to NER columns only.  The
    # intent head is only needed for B CLS rows, so its (tiny) log_softmax is
    # done in the wrapper instead of once per token here.
    ml = jnp.where(ner_mask, logits, -1e30)
    m = jnp.max(ml, axis=-1, keepdims=True)
    s = jnp.sum(jnp.where(ner_mask, jnp.exp(ml - m), 0.0),
                axis=-1, keepdims=True)
    lse = m + jnp.log(s)

    out = jnp.where(ner_mask, logits - lse,
                    jnp.where(int_mask, logits, 0.0))
    o_ref[...] = out.astype(o_ref.dtype)               # unmasked 128-lane store


def pack_ner_intent_heads(ner_w, ner_b, intent_w, intent_b, *,
                          compute_dtype=jnp.bfloat16):
    """Pack both linear heads into one lane-dense weight/bias (do this ONCE
    at model-load time, not per forward call)."""
    H4, NE = ner_w.shape
    NI = intent_w.shape[1]
    N_pad = max(128, pl.cdiv(NE + NI, 128) * 128)      # lane-dense output slab

    w_pack = jnp.zeros((H4, N_pad), jnp.float32)
    w_pack = w_pack.at[:, :NE].set(ner_w.astype(jnp.float32))
    w_pack = w_pack.at[:, NE:NE + NI].set(intent_w.astype(jnp.float32))
    b_pack = jnp.zeros((1, N_pad), jnp.float32)
    b_pack = b_pack.at[:, :NE].set(ner_b.astype(jnp.float32).reshape(-1))
    b_pack = b_pack.at[:, NE:NE + NI].set(intent_b.astype(jnp.float32).reshape(-1))
    # Weight is read by the MXU in bf16 (f32 accumulation); bias stays f32.
    return w_pack.astype(compute_dtype), b_pack, NE, NI


def _pick_row_tile(M, tm):
    """Fixed, 16-aligned row tile; grid = cdiv(M, tm) masks any ragged tail."""
    if tm is None:
        tm = 1024
    tm = max(1, min(tm, M))
    if M >= 32:
        tm = max(16, (tm // 16) * 16)
        if pl.cdiv(M, tm) < 2:
            # Ensure >= 2 grid steps so the "parallel" axis can shard across
            # both TensorCores on v7x (and DMA/compute actually overlap).
            tm = ((pl.cdiv(M, 2) + 15) // 16) * 16
    return tm


def ner_intent_forward(hidden_states, w_pack, b_pack, num_entity, num_intent,
                       *, tm=None):
    """hidden_states: list/tuple of (B, S, H) arrays (BERT hidden-state stack)
    or a pre-stacked (L, B, S, H) array.  w_pack/b_pack from
    pack_ner_intent_heads (packed once, reused across calls)."""
    if isinstance(hidden_states, (list, tuple)):
        hs4 = jnp.stack([hidden_states[i] for i in (-4, -3, -2, -1)], axis=0)
    else:
        hs4 = hidden_states[-4:]
    _, B, S, H = hs4.shape
    M = B * S
    NE, NI = num_entity, num_intent
    N_pad = w_pack.shape[1]
    assert w_pack.shape[0] == 4 * H

    # dropout(p=0.1) is the identity in eval/inference mode.
    # TODO(synk): training-mode dropout (stateful PRNG masking) not implemented.

    # One contiguous (4, M, H) bf16 slab: the stack/slice + cast + reshape fuse
    # into a single XLA op, and the kernel reads half the HBM bytes of f32.
    # (Ideally the backbone already produces bf16 activations.)
    hs4 = hs4.reshape(4, M, H).astype(w_pack.dtype)

    tm = _pick_row_tile(M, tm)
    grid = (pl.cdiv(M, tm),)

    # Explicit scoped-VMEM budget: double-buffered activations + output,
    # resident weight/bias, plus slack.  Clamped to v7x's 64 MiB per-TC VMEM.
    act_bytes = 4 * tm * H * hs4.dtype.itemsize
    out_bytes = tm * N_pad * 4
    w_bytes = 4 * H * N_pad * w_pack.dtype.itemsize
    b_bytes = 8 * N_pad * 4
    need = 2 * (act_bytes + out_bytes + w_bytes + b_bytes)
    vmem_limit = int(min(64 * 1024 * 1024, max(32 * 1024 * 1024, 2 * need)))

    kernel = functools.partial(fused_heads_kernel, hidden=H,
                               num_entity=NE, num_intent=NI)
    out = pl.pallas_call(
        kernel,
        out_shape=jax.ShapeDtypeStruct((M, N_pad), jnp.float32),
        grid=grid,
        in_specs=[
            pl.BlockSpec((4, tm, H), lambda i: (0, i, 0)),       # stacked acts
            pl.BlockSpec((4 * H, N_pad), lambda i: (0, 0)),      # resident W
            pl.BlockSpec((1, N_pad), lambda i: (0, 0)),          # resident b
        ],
        out_specs=pl.BlockSpec((tm, N_pad), lambda i: (i, 0)),
        compiler_params=pltpu.CompilerParams(
            dimension_semantics=("parallel",),
            vmem_limit_bytes=vmem_limit),
    )(hs4, w_pack, b_pack)

    # Unpack the two heads (tiny XLA ops on the lane-dense slab).
    entity_log_probs = out[:, :NE]                                   # (B*S, NE)
    intent_logits = out.reshape(B, S, N_pad)[:, 0, NE:NE + NI]       # (B, NI)
    intent_log_probs = jax.nn.log_softmax(intent_logits, axis=-1)
    return entity_log_probs, intent_log_probs


def _reference(hidden_states, ner_w, ner_b, intent_w, intent_b):
    """Pure-JAX f32 reference of the PyTorch head."""
    last4 = jnp.concatenate([hidden_states[i] for i in (-4, -3, -2, -1)],
                            axis=-1)
    B, S, H4 = last4.shape
    ent = jax.nn.log_softmax(last4.reshape(B * S, H4) @ ner_w + ner_b, axis=-1)
    itn = jax.nn.log_softmax(last4[:, 0, :] @ intent_w + intent_b, axis=-1)
    return ent, itn


if __name__ == "__main__":
    # Small, BERT-consistent shapes.
    H = 32                       # hidden_size
    NUM_LAYERS = 5               # embedding output + 4 transformer layers
    NUM_ENTITY = 9
    NUM_INTENT = 5
    H4 = 4 * H                   # 128 — feature dim of the concatenated states

    key = jax.random.PRNGKey(0)
    khs, knw, knb, kiw, kib, khs2 = jax.random.split(key, 6)

    # nn.Linear(4*H, num_labels) equivalents, stored as (in, out) for x @ W + b.
    ner_w = 0.02 * jax.random.normal(knw, (H4, NUM_ENTITY), dtype=jnp.float32)
    ner_b = 0.01 * jax.random.normal(knb, (1, NUM_ENTITY), dtype=jnp.float32)
    intent_w = 0.02 * jax.random.normal(kiw, (H4, NUM_INTENT), dtype=jnp.float32)
    intent_b = 0.01 * jax.random.normal(kib, (1, NUM_INTENT), dtype=jnp.float32)

    # Pack the two heads ONCE (model-load time), bf16 weights / f32 bias.
    w_pack, b_pack, NE, NI = pack_ner_intent_heads(
        ner_w, ner_b, intent_w, intent_b)

    def run_and_check(B, S, hs_key, tag):
        # Synthetic BERT hidden-state stack (stand-in for the pretrained
        # backbone, which has no Pallas equivalent).
        hs_stack = jax.random.normal(hs_key, (NUM_LAYERS, B, S, H),
                                     dtype=jnp.float32)
        hidden_states = [hs_stack[i] for i in range(NUM_LAYERS)]

        entity_logp, intent_logp = ner_intent_forward(
            hidden_states, w_pack, b_pack, NE, NI)
        jax.block_until_ready((entity_logp, intent_logp))

        ref_ent, ref_int = _reference(hidden_states, ner_w, ner_b,
                                      intent_w, intent_b)

        assert entity_logp.shape == (B * S, NUM_ENTITY), tag
        assert intent_logp.shape == (B, NUM_INTENT), tag
        # bf16 inputs/weights vs f32 reference -> loose tolerance; f32
        # accumulation keeps errors at the few-1e-3 level.
        assert jnp.allclose(entity_logp, ref_ent, atol=3e-2), tag
        assert jnp.allclose(intent_logp, ref_int, atol=3e-2), tag
        assert jnp.allclose(jnp.sum(jnp.exp(entity_logp), axis=-1), 1.0,
                            atol=1e-4), tag
        assert jnp.allclose(jnp.sum(jnp.exp(intent_logp), axis=-1), 1.0,
                            atol=1e-4), tag

    # Primary small demo (single-tile grid).
    run_and_check(B=2, S=8, hs_key=khs, tag="small")
    # Larger demo exercising the multi-step parallel grid + ragged last tile.
    run_and_check(B=3, S=40, hs_key=khs2, tag="ragged")

    print("KERNEL_OK")
</pallas_src>

<mosaic_0001>
module attributes {stable_mosaic.version = 11 : i64} {
  func.func @fused_heads_kernel(%arg0: i32, %arg1: memref<4x16x32xbf16, #tpu.memory_space<vmem>>, %arg2: memref<128x128xbf16, #tpu.memory_space<vmem>>, %arg3: memref<1x128xf32, #tpu.memory_space<vmem>>, %arg4: memref<16x128xf32, #tpu.memory_space<vmem>>) attributes {dimension_semantics = [#tpu.dimension_semantics<parallel>], iteration_bounds = array<i64: 1>, scalar_prefetch = 0 : i64, scratch_operands = 0 : i64, tpu.core_type = #tpu.core_type<tc>, window_params = [{transform_indices = @transform_0, window_bounds = array<i64: 4, 16, 32>}, {pipeline_mode = #tpu.pipeline_mode<synchronous>, transform_indices = @transform_1, window_bounds = array<i64: 128, 128>}, {pipeline_mode = #tpu.pipeline_mode<synchronous>, transform_indices = @transform_2, window_bounds = array<i64: 1, 128>}, {transform_indices = @transform_3, window_bounds = array<i64: 16, 128>}]} {
    %c0 = arith.constant 0 : index
    %c0_0 = arith.constant 0 : index
    %c0_1 = arith.constant 0 : index
    %0 = vector.load %arg1[%c0, %c0_0, %c0_1] : memref<4x16x32xbf16, #tpu.memory_space<vmem>>, vector<1x16x32xbf16>
    %1 = vector.shape_cast %0 : vector<1x16x32xbf16> to vector<16x32xbf16>
    %c0_2 = arith.constant 0 : index
    %c0_3 = arith.constant 0 : index
    %2 = vector.load %arg2[%c0_2, %c0_3] : memref<128x128xbf16, #tpu.memory_space<vmem>>, vector<32x128xbf16>
    %cst = arith.constant dense<0.000000e+00> : vector<16x128xf32>
    %3 = tpu.matmul %1, %2, %cst {dimension_numbers = #tpu.dot_dimension_numbers<[1], [0], [0], [1], [0, 0, 1, 1], [], []>} : vector<16x32xbf16>, vector<32x128xbf16>, vector<16x128xf32> -> vector<16x128xf32>
    %c1 = arith.constant 1 : index
    %c0_4 = arith.constant 0 : index
    %c0_5 = arith.constant 0 : index
    %4 = vector.load %arg1[%c1, %c0_4, %c0_5] : memref<4x16x32xbf16, #tpu.memory_space<vmem>>, vector<1x16x32xbf16>
    %5 = vector.shape_cast %4 : vector<1x16x32xbf16> to vector<16x32xbf16>
    %c32 = arith.constant 32 : index
    %c0_6 = arith.constant 0 : index
    %6 = vector.load %arg2[%c32, %c0_6] : memref<128x128xbf16, #tpu.memory_space<vmem>>, vector<32x128xbf16>
    %cst_7 = arith.constant dense<0.000000e+00> : vector<16x128xf32>
    %7 = tpu.matmul %5, %6, %cst_7 {dimension_numbers = #tpu.dot_dimension_numbers<[1], [0], [0], [1], [0, 0, 1, 1], [], []>} : vector<16x32xbf16>, vector<32x128xbf16>, vector<16x128xf32> -> vector<16x128xf32>
    %8 = arith.addf %3, %7 : vector<16x128xf32>
    %c2 = arith.constant 2 : index
    %c0_8 = arith.constant 0 : index
    %c0_9 = arith.constant 0 : index
    %9 = vector.load %arg1[%c2, %c0_8, %c0_9] : memref<4x16x32xbf16, #tpu.memory_space<vmem>>, vector<1x16x32xbf16>
    %10 = vector.shape_cast %9 : vector<1x16x32xbf16> to vector<16x32xbf16>
    %c64 = arith.constant 64 : index
    %c0_10 = arith.constant 0 : index
    %11 = vector.load %arg2[%c64, %c0_10] : memref<128x128xbf16, #tpu.memory_space<vmem>>, vector<32x128xbf16>
    %cst_11 = arith.constant dense<0.000000e+00> : vector<16x128xf32>
    %12 = tpu.matmul %10, %11, %cst_11 {dimension_numbers = #tpu.dot_dimension_numbers<[1], [0], [0], [1], [0, 0, 1, 1], [], []>} : vector<16x32xbf16>, vector<32x128xbf16>, vector<16x128xf32> -> vector<16x128xf32>
    %13 = arith.addf %8, %12 : vector<16x128xf32>
    %c3 = arith.constant 3 : index
    %c0_12 = arith.constant 0 : index
    %c0_13 = arith.constant 0 : index
    %14 = vector.load %arg1[%c3, %c0_12, %c0_13] : memref<4x16x32xbf16, #tpu.memory_space<vmem>>, vector<1x16x32xbf16>
    %15 = vector.shape_cast %14 : vector<1x16x32xbf16> to vector<16x32xbf16>
    %c96 = arith.constant 96 : index
    %c0_14 = arith.constant 0 : index
    %16 = vector.load %arg2[%c96, %c0_14] : memref<128x128xbf16, #tpu.memory_space<vmem>>, vector<32x128xbf16>
    %cst_15 = arith.constant dense<0.000000e+00> : vector<16x128xf32>
    %17 = tpu.matmul %15, %16, %cst_15 {dimension_numbers = #tpu.dot_dimension_numbers<[1], [0], [0], [1], [0, 0, 1, 1], [], []>} : vector<16x32xbf16>, vector<32x128xbf16>, vector<16x128xf32> -> vector<16x128xf32>
    %18 = arith.addf %13, %17 : vector<16x128xf32>
    %c0_16 = arith.constant 0 : index
    %c0_17 = arith.constant 0 : index
    %19 = vector.load %arg3[%c0_16, %c0_17] : memref<1x128xf32, #tpu.memory_space<vmem>>, vector<1x128xf32>
    %20 = vector.broadcast %19 : vector<1x128xf32> to vector<16x128xf32>
    %21 = arith.addf %18, %20 : vector<16x128xf32>
    %22 = tpu.iota {dimensions = array<i32: 1>} : vector<16x128xi32>
    %c9_i32 = arith.constant 9 : i32
    %23 = vector.broadcast %c9_i32 : i32 to vector<16x128xi32>
    %24 = arith.cmpi slt, %22, %23 : vector<16x128xi32>
    %c9_i32_18 = arith.constant 9 : i32
    %25 = vector.broadcast %c9_i32_18 : i32 to vector<16x128xi32>
    %26 = arith.cmpi sge, %22, %25 : vector<16x128xi32>
    %c14_i32 = arith.constant 14 : i32
    %27 = vector.broadcast %c14_i32 : i32 to vector<16x128xi32>
    %28 = arith.cmpi slt, %22, %27 : vector<16x128xi32>
    %29 = arith.andi %26, %28 : vector<16x128xi1>
    %cst_19 = arith.constant -1.000000e+30 : f32
    %30 = vector.broadcast %cst_19 : f32 to vector<16x128xf32>
    %31 = arith.select %24, %21, %30 : vector<16x128xi1>, vector<16x128xf32>
    %cst_20 = arith.constant dense<0xFF800000> : vector<16xf32>
    %32 = vector.multi_reduction <maximumf>, %31, %cst_20 [1] : vector<16x128xf32> to vector<16xf32>
    %33 = vector.shape_cast %32 : vector<16xf32> to vector<16x1xf32>
    %34 = vector.broadcast %33 : vector<16x1xf32> to vector<16x128xf32>
    %35 = arith.subf %31, %34 : vector<16x128xf32>
    %36 = math.exp %35 : vector<16x128xf32>
    %cst_21 = arith.constant 0.000000e+00 : f32
    %37 = vector.broadcast %cst_21 : f32 to vector<16x128xf32>
    %38 = arith.select %24, %36, %37 : vector<16x128xi1>, vector<16x128xf32>
    %cst_22 = arith.constant dense<0.000000e+00> : vector<16xf32>
    %39 = vector.multi_reduction <add>, %38, %cst_22 [1] : vector<16x128xf32> to vector<16xf32>
    %40 = vector.shape_cast %39 : vector<16xf32> to vector<16x1xf32>
    %41 = math.log %40 : vector<16x1xf32>
    %42 = arith.addf %33, %41 : vector<16x1xf32>
    %43 = vector.broadcast %42 : vector<16x1xf32> to vector<16x128xf32>
    %44 = arith.subf %21, %43 : vector<16x128xf32>
    %cst_23 = arith.constant 0.000000e+00 : f32
    %45 = vector.broadcast %cst_23 : f32 to vector<16x128xf32>
    %46 = arith.select %29, %21, %45 : vector<16x128xi1>, vector<16x128xf32>
    %47 = arith.select %24, %44, %46 : vector<16x128xi1>, vector<16x128xf32>
    %c0_24 = arith.constant 0 : index
    %c0_25 = arith.constant 0 : index
    %48 = vector.load %arg4[%c0_24, %c0_25] : memref<16x128xf32, #tpu.memory_space<vmem>>, vector<16x128xf32>
    tpu.vector_store %arg4[%c0_24, %c0_25], %47 {strides = array<i32>} : memref<16x128xf32, #tpu.memory_space<vmem>>, vector<16x128xf32>,
    return
  }
  func.func @transform_0(%arg0: i32) -> (i32, i32, i32) {
    %c0_i32 = arith.constant 0 : i32
    %c0_i32_0 = arith.constant 0 : i32
    %c0_i32_1 = arith.constant 0 : i32
    return %c0_i32, %arg0, %c0_i32_0 : i32, i32, i32
  }
  func.func @transform_1(%arg0: i32) -> (i32, i32) {
    %c0_i32 = arith.constant 0 : i32
    %c0_i32_0 = arith.constant 0 : i32
    %c0_i32_1 = arith.constant 0 : i32
    return %c0_i32, %c0_i32_0 : i32, i32
  }
  func.func @transform_2(%arg0: i32) -> (i32, i32) {
    %c0_i32 = arith.constant 0 : i32
    %c0_i32_0 = arith.constant 0 : i32
    %c0_i32_1 = arith.constant 0 : i32
    return %c0_i32, %c0_i32_0 : i32, i32
  }
  func.func @transform_3(%arg0: i32) -> (i32, i32) {
    %c0_i32 = arith.constant 0 : i32
    %c0_i32_0 = arith.constant 0 : i32
    return %arg0, %c0_i32 : i32, i32
  }
}

</mosaic_0001>

<llo_original>
// kernel: tpu_custom_call.1
$region0: #{tpu_custom_call.1}
  #allocation0 [shape = 'u32[]', space=smem, size = 0x4, offset = 0x4, fixed_abs, tag = 'smem constant byte address 0x4 - core index']
  #allocation1 [shape = 'u32[144,128]{1,0:T(1,128)}', space=vmem, size = 0x12000, scoped, tag = 'internal scratch']
  %s0 = inlined_call_operand.hbm [shape: bf16[4,16,32], index: 0, kind: input, shape index: {}]
  %s1 = inlined_call_operand.hbm [shape: bf16[128,128], index: 1, kind: input, shape index: {}]
  %s2 = inlined_call_operand.vmem [shape: f32[1,128], index: 2, kind: input, shape index: {}]
  %s3 = inlined_call_operand.hbm [shape: f32[16,128], index: 3, kind: output, shape index: {}]
  %s4 = sld [smem:[#allocation0]]
  $region30: #{tpu_custom_call.1} parent=0
    _
  %s6 = ssub.s32 1, %s4
  %s7 = scalar_select 0, %s6, %s4
  $region1: #{tpu_custom_call.1} parent=0
    #allocation2 [shape = 'u8[16384]{0}', space=vmem, size = 0x4000, scoped, tag = 'input window, operand 0, single buffered']
    #allocation3 [shape = 's32[1]{0}', space=sflag, size = 0x4, scoped, tag = 'scoped memory for tpu_custom_call.1']
    #allocation4 [shape = 's32[1]{0}', space=sflag, size = 0x4, scoped, tag = 'scoped memory for tpu_custom_call.1']
    #allocation5 [shape = 'u8[32768]{0}', space=vmem, size = 0x8000, scoped, tag = 'input window, operand 1, single buffered']
    #allocation6 [shape = 's32[1]{0}', space=sflag, size = 0x4, scoped, tag = 'scoped memory for tpu_custom_call.1']
    #allocation7 [shape = 'u8[8192]{0}', space=vmem, size = 0x2000, scoped, tag = 'output window, operand 0, single buffered']
    %8 = vsyncpa [#allocation3], 0
    %9 = vsyncpa [#allocation6], 0
    %10 = vsyncpa [#allocation4], 0
    // Predicated region
    $region2: #{tpu_custom_call.1} parent=1 // pred_check
      _
    $region3: #{tpu_custom_call.1} parent=1 // pred_check_branch
      %12 = sbr.rel (0) target = $region5
    $region4: #{tpu_custom_call.1} parent=1 // pred_region
      %s14 = ssub.s32 512, 512
      %15 = vsyncadd [#allocation3], %s14
      %s16 = sshll.u32 [#allocation2], 4
      %s17 = int_to_ptr.vmem [resolvable:$true] %s16
      %22 = dma.hbm_to_vmem [thread:$0]  %s0, 512, %s17, [#allocation3], 64, 64, 4
    $region5: #{tpu_custom_call.1} parent=1 // pred_fallthru
      _
    // Predicated region
    $region6: #{tpu_custom_call.1} parent=1 // pred_check
      _
    $region7: #{tpu_custom_call.1} parent=1 // pred_check_branch
      %24 = sbr.rel (0) target = $region9
    $region8: #{tpu_custom_call.1} parent=1 // pred_region
      %s26 = ssub.s32 1024, 1024
      %27 = vsyncadd [#allocation6], %s26
      %s28 = sshll.u32 [#allocation5], 4
      %s29 = int_to_ptr.vmem [resolvable:$true] %s28
      %34 = dma.hbm_to_vmem [thread:$0]  %s1, 1024, %s29, [#allocation6], 64, 64, 4
    $region9: #{tpu_custom_call.1} parent=1 // pred_fallthru
      _
    // Predicated region
    $region10: #{tpu_custom_call.1} parent=1 // pred_check
      _
    $region11: #{tpu_custom_call.1} parent=1 // pred_check_branch
      %36 = sbr.rel (0) target = $region13
    $region12: #{tpu_custom_call.1} parent=1 // pred_region
      _
    $region13: #{tpu_custom_call.1} parent=1 // pred_fallthru
      _
    // Predicated region
    $region14: #{tpu_custom_call.1} parent=1 // pred_check
      _
    $region15: #{tpu_custom_call.1} parent=1 // pred_check_branch
      %38 = sbr.rel (0) target = $region17
    $region16: #{tpu_custom_call.1} parent=1 // pred_region
      %39 = dma.done [#allocation3], 512
    $region17: #{tpu_custom_call.1} parent=1 // pred_fallthru
      _
    // Predicated region
    $region18: #{tpu_custom_call.1} parent=1 // pred_check
      _
    $region19: #{tpu_custom_call.1} parent=1 // pred_check_branch
      %41 = sbr.rel (0) target = $region21
    $region20: #{tpu_custom_call.1} parent=1 // pred_region
      %42 = dma.done [#allocation6], 1024
    $region21: #{tpu_custom_call.1} parent=1 // pred_fallthru
      _
    %v44 = vld [vmem:[#allocation2] sm:$0xf]
    %v45 = vld [vmem:[#allocation2 + $0x4] sm:$0xf]
    %v46 = vld [vmem:[#allocation5] sm:$0xf]
    %v47 = vld [vmem:[#allocation5 + $0x4] sm:$0xf]
    %v48 = vld [vmem:[#allocation5 + $0x8] sm:$0xf]
    %v49 = vld [vmem:[#allocation5 + $0xc] sm:$0xf]
    %s50 = scalar_lea.vmem [#allocation2], 8
    %v51 = vld [vmem:[%s50] sm:$0xf]
    %v52 = vld [vmem:[%s50 + $0x4] sm:$0xf]
    %v53 = vld [vmem:[#allocation5 + $0x10] sm:$0xf]
    %v54 = vld [vmem:[#allocation5 + $0x14] sm:$0xf]
    %v55 = vld [vmem:[#allocation5 + $0x18] sm:$0xf]
    %v56 = vld [vmem:[#allocation5 + $0x1c] sm:$0xf]
    %v59 = vunpack.c.l.b16 %v51
    %v60 = vunpack.c.l.b16 %v52
    %v61 = vpack.c.b16 %v60, %v59
    %v66 = vunpack.c.l.b16 %v53
    %v67 = vunpack.c.l.b16 %v54
    %v68 = vunpack.c.l.b16 %v55
    %v69 = vunpack.c.l.b16 %v56
    %v70 = vpack.c.b16 %v67, %v66
    %v71 = vpack.c.b16 %v69, %v68
    %vm74 = vcmask 261120
    %v76 = vsel %vm74, %v61, 0
    %78 = vmatprep.subr.bf16.mxu0 0
    %79 = vmatpush1.bf16.msra.mxu0 %v70
    %80 = vmatprep.subr.bf16.mxu0 0
    %81 = vmatpush1.bf16.msra.mxu0 %v71
    %82 = vmatprep.subr.bf16.mxu0 0
    %83 = vmatpush1.bf16.msra.mxu0 0
    %84 = vmatprep.subr.bf16.mxu0 0
    %85 = vmatpush1.bf16.msra.mxu0 0
    %86 = vmatprep.subr.bf16.mxu0 0
    %87 = vmatpush1.bf16.msra.mxu0 0
    %88 = vmatprep.subr.bf16.mxu0 0
    %89 = vmatpush1.bf16.msra.mxu0 0
    %90 = vmatprep.subr.bf16.mxu0 0
    %91 = vmatpush1.bf16.msra.mxu0 0
    %92 = vmatprep.subr.bf16.mxu0 0
    %93 = vmatpush1.bf16.msra.mxu0 0
    %94 = vmatprep.subr.bf16.mxu0 0
    %95 = vmatpush1.bf16.msra.mxu0 0
    %96 = vmatprep.subr.bf16.mxu0 0
    %97 = vmatpush1.bf16.msra.mxu0 0
    %98 = vmatprep.subr.bf16.mxu0 0
    %99 = vmatpush1.bf16.msra.mxu0 0
    %100 = vmatprep.subr.bf16.mxu0 0
    %101 = vmatpush1.bf16.msra.mxu0 0
    %102 = vmatprep.subr.bf16.mxu0 0
    %103 = vmatpush1.bf16.msra.mxu0 0
    %104 = vmatprep.subr.bf16.mxu0 0
    %105 = vmatpush1.bf16.msra.mxu0 0
    %106 = vmatprep.subr.bf16.mxu0 0
    %107 = vmatpush1.bf16.msra.mxu0 0
    %108 = vmatprep.subr.bf16.mxu0 0
    %109 = vmatpush1.bf16.msra.mxu0 0
    %110 = vmatprep.mubr.bf16.mxu0 0
    %111 = vmatmul.mubr.bf16.gmra.mrb[0].mxu0 %v76
    %v112 = vpop.f32.mrb[0].mxu0
    %v113 = vadd.f32 0.0, %v112
    %v114 = vpop.f32.mrb[0].mxu0
    %v115 = vpop.f32.mrb[0].mxu0
    %v116 = vadd.f32 0.0, %v115
    %v117 = vpop.f32.mrb[0].mxu0
    %118 = vdwg.mxu0
    %v121 = vunpack.c.l.b16 %v44
    %v122 = vunpack.c.l.b16 %v45
    %v123 = vpack.c.b16 %v122, %v121
    %v128 = vunpack.c.l.b16 %v46
    %v129 = vunpack.c.l.b16 %v47
    %v130 = vunpack.c.l.b16 %v48
    %v131 = vunpack.c.l.b16 %v49
    %v132 = vpack.c.b16 %v129, %v128
    %v133 = vpack.c.b16 %v131, %v130
    %v137 = vsel %vm74, %v123, 0
    %139 = vmatprep.subr.bf16.mxu0 0
    %140 = vmatpush1.bf16.msra.mxu0 %v132
    %141 = vmatprep.subr.bf16.mxu0 0
    %142 = vmatpush1.bf16.msra.mxu0 %v133
    %143 = vmatprep.subr.bf16.mxu0 0
    %144 = vmatpush1.bf16.msra.mxu0 0
    %145 = vmatprep.subr.bf16.mxu0 0
    %146 = vmatpush1.bf16.msra.mxu0 0
    %147 = vmatprep.subr.bf16.mxu0 0
    %148 = vmatpush1.bf16.msra.mxu0 0
    %149 = vmatprep.subr.bf16.mxu0 0
    %150 = vmatpush1.bf16.msra.mxu0 0
    %151 = vmatprep.subr.bf16.mxu0 0
    %152 = vmatpush1.bf16.msra.mxu0 0
    %153 = vmatprep.subr.bf16.mxu0 0
    %154 = vmatpush1.bf16.msra.mxu0 0
    %155 = vmatprep.subr.bf16.mxu0 0
    %156 = vmatpush1.bf16.msra.mxu0 0
    %157 = vmatprep.subr.bf16.mxu0 0
    %158 = vmatpush1.bf16.msra.mxu0 0
    %159 = vmatprep.subr.bf16.mxu0 0
    %160 = vmatpush1.bf16.msra.mxu0 0
    %161 = vmatprep.subr.bf16.mxu0 0
    %162 = vmatpush1.bf16.msra.mxu0 0
    %163 = vmatprep.subr.bf16.mxu0 0
    %164 = vmatpush1.bf16.msra.mxu0 0
    %165 = vmatprep.subr.bf16.mxu0 0
    %166 = vmatpush1.bf16.msra.mxu0 0
    %167 = vmatprep.subr.bf16.mxu0 0
    %168 = vmatpush1.bf16.msra.mxu0 0
    %169 = vmatprep.subr.bf16.mxu0 0
    %170 = vmatpush1.bf16.msra.mxu0 0
    %171 = vmatprep.mubr.bf16.mxu0 0
    %172 = vmatmul.mubr.bf16.gmra.mrb[0].mxu0 %v137
    %v173 = vpop.f32.mrb[0].mxu0
    %v174 = vadd.f32 %v113, %v173
    %v175 = vpop.f32.mrb[0].mxu0
    %v176 = vpop.f32.mrb[0].mxu0
    %v177 = vadd.f32 %v116, %v176
    %v178 = vpop.f32.mrb[0].mxu0
    %179 = vdwg.mxu0
    %s180 = scalar_lea.vmem [#allocation2], 16
    %v181 = vld [vmem:[%s180] sm:$0xf]
    %v182 = vld [vmem:[%s180 + $0x4] sm:$0xf]
    %v183 = vld [vmem:[#allocation5 + $0x20] sm:$0xf]
    %v184 = vld [vmem:[#allocation5 + $0x24] sm:$0xf]
    %v185 = vld [vmem:[#allocation5 + $0x28] sm:$0xf]
    %v186 = vld [vmem:[#allocation5 + $0x2c] sm:$0xf]
    %v189 = vunpack.c.l.b16 %v181
    %v190 = vunpack.c.l.b16 %v182
    %v191 = vpack.c.b16 %v190, %v189
    %v196 = vunpack.c.l.b16 %v183
    %v197 = vunpack.c.l.b16 %v184
    %v198 = vunpack.c.l.b16 %v185
    %v199 = vunpack.c.l.b16 %v186
    %v200 = vpack.c.b16 %v197, %v196
    %v201 = vpack.c.b16 %v199, %v198
    %v205 = vsel %vm74, %v191, 0
    %207 = vmatprep.subr.bf16.mxu0 0
    %208 = vmatpush1.bf16.msra.mxu0 %v200
    %209 = vmatprep.subr.bf16.mxu0 0
    %210 = vmatpush1.bf16.msra.mxu0 %v201
    %211 = vmatprep.subr.bf16.mxu0 0
    %212 = vmatpush1.bf16.msra.mxu0 0
    %213 = vmatprep.subr.bf16.mxu0 0
    %214 = vmatpush1.bf16.msra.mxu0 0
    %215 = vmatprep.subr.bf16.mxu0 0
    %216 = vmatpush1.bf16.msra.mxu0 0
    %217 = vmatprep.subr.bf16.mxu0 0
    %218 = vmatpush1.bf16.msra.mxu0 0
    %219 = vmatprep.subr.bf16.mxu0 0
    %220 = vmatpush1.bf16.msra.mxu0 0
    %221 = vmatprep.subr.bf16.mxu0 0
    %222 = vmatpush1.bf16.msra.mxu0 0
    %223 = vmatprep.subr.bf16.mxu0 0
    %224 = vmatpush1.bf16.msra.mxu0 0
    %225 = vmatprep.subr.bf16.mxu0 0
    %226 = vmatpush1.bf16.msra.mxu0 0
    %227 = vmatprep.subr.bf16.mxu0 0
    %228 = vmatpush1.bf16.msra.mxu0 0
    %229 = vmatprep.subr.bf16.mxu0 0
    %230 = vmatpush1.bf16.msra.mxu0 0
    %231 = vmatprep.subr.bf16.mxu0 0
    %232 = vmatpush1.bf16.msra.mxu0 0
    %233 = vmatprep.subr.bf16.mxu0 0
    %234 = vmatpush1.bf16.msra.mxu0 0
    %235 = vmatprep.subr.bf16.mxu0 0
    %236 = vmatpush1.bf16.msra.mxu0 0
    %237 = vmatprep.subr.bf16.mxu0 0
    %238 = vmatpush1.bf16.msra.mxu0 0
    %239 = vmatprep.mubr.bf16.mxu0 0
    %240 = vmatmul.mubr.bf16.gmra.mrb[0].mxu0 %v205
    %v241 = vpop.f32.mrb[0].mxu0
    %v242 = vadd.f32 0.0, %v241
    %v243 = vpop.f32.mrb[0].mxu0
    %v244 = vpop.f32.mrb[0].mxu0
    %v245 = vadd.f32 0.0, %v244
    %v246 = vpop.f32.mrb[0].mxu0
    %247 = vdwg.mxu0
    %v248 = vadd.f32 %v174, %v242
    %v249 = vadd.f32 %v177, %v245
    %s250 = scalar_lea.vmem [#allocation2], 24
    %v251 = vld [vmem:[%s250] sm:$0xf]
    %v252 = vld [vmem:[%s250 + $0x4] sm:$0xf]
    %v253 = vld [vmem:[#allocation5 + $0x30] sm:$0xf]
    %v254 = vld [vmem:[#allocation5 + $0x34] sm:$0xf]
    %v255 = vld [vmem:[#allocation5 + $0x38] sm:$0xf]
    %v256 = vld [vmem:[#allocation5 + $0x3c] sm:$0xf]
    %v259 = vunpack.c.l.b16 %v251
    %v260 = vunpack.c.l.b16 %v252
    %v261 = vpack.c.b16 %v260, %v259
    %v266 = vunpack.c.l.b16 %v253
    %v267 = vunpack.c.l.b16 %v254
    %v268 = vunpack.c.l.b16 %v255
    %v269 = vunpack.c.l.b16 %v256
    %v270 = vpack.c.b16 %v267, %v266
    %v271 = vpack.c.b16 %v269, %v268
    %v275 = vsel %vm74, %v261, 0
    %277 = vmatprep.subr.bf16.mxu0 0
    %278 = vmatpush1.bf16.msra.mxu0 %v270
    %279 = vmatprep.subr.bf16.mxu0 0
    %280 = vmatpush1.bf16.msra.mxu0 %v271
    %281 = vmatprep.subr.bf16.mxu0 0
    %282 = vmatpush1.bf16.msra.mxu0 0
    %283 = vmatprep.subr.bf16.mxu0 0
    %284 = vmatpush1.bf16.msra.mxu0 0
    %285 = vmatprep.subr.bf16.mxu0 0
    %286 = vmatpush1.bf16.msra.mxu0 0
    %287 = vmatprep.subr.bf16.mxu0 0
    %288 = vmatpush1.bf16.msra.mxu0 0
    %289 = vmatprep.subr.bf16.mxu0 0
    %290 = vmatpush1.bf16.msra.mxu0 0
    %291 = vmatprep.subr.bf16.mxu0 0
    %292 = vmatpush1.bf16.msra.mxu0 0
    %293 = vmatprep.subr.bf16.mxu0 0
    %294 = vmatpush1.bf16.msra.mxu0 0
    %295 = vmatprep.subr.bf16.mxu0 0
    %296 = vmatpush1.bf16.msra.mxu0 0
    %297 = vmatprep.subr.bf16.mxu0 0
    %298 = vmatpush1.bf16.msra.mxu0 0
    %299 = vmatprep.subr.bf16.mxu0 0
    %300 = vmatpush1.bf16.msra.mxu0 0
    %301 = vmatprep.subr.bf16.mxu0 0
    %302 = vmatpush1.bf16.msra.mxu0 0
    %303 = vmatprep.subr.bf16.mxu0 0
    %304 = vmatpush1.bf16.msra.mxu0 0
    %305 = vmatprep.subr.bf16.mxu0 0
    %306 = vmatpush1.bf16.msra.mxu0 0
    %307 = vmatprep.subr.bf16.mxu0 0
    %308 = vmatpush1.bf16.msra.mxu0 0
    %309 = vmatprep.mubr.bf16.mxu0 0
    %310 = vmatmul.mubr.bf16.gmra.mrb[0].mxu0 %v275
    %v311 = vpop.f32.mrb[0].mxu0
    %v312 = vadd.f32 0.0, %v311
    %v313 = vpop.f32.mrb[0].mxu0
    %v314 = vpop.f32.mrb[0].mxu0
    %v315 = vadd.f32 0.0, %v314
    %v316 = vpop.f32.mrb[0].mxu0
    %317 = vdwg.mxu0
    %v318 = vadd.f32 %v248, %v312
    %v319 = vadd.f32 %v249, %v315
    %v320 = vld [vmem:[%s2] sm:$0x1]
    %v322 = vlaneseq
    %v323 = vshrl.u32 %v322, 7
    %v324 = vsub.s32 0, %v323
    %v325 = vrot.slane %v320, %v324
    %v327 = vadd.f32 %v318, %v325
    %v328 = vadd.f32 %v319, %v325
    %v329 = vlaneseq
    %v330 = vand.u32 %v329, 127
    %vm331 = vcmp.lt.s32.totalorder %v330, 9
    %vm332 = vcmp.ge.s32.totalorder %v330, 9
    %vm333 = vcmp.lt.s32.totalorder %v330, 14
    %vm334 = vmand %vm332, %vm333
    %v335 = vsel %vm331, %v327, -1e+30
    %v336 = vsel %vm331, %v328, -1e+30
    %337 = vmax.xlane.f32.xlu0 %v335
    %v338 = vpop.xlane.xlu0 %337
    %339 = vmax.xlane.f32.xlu0 %v336
    %v340 = vpop.xlane.xlu0 %339
    %v341 = vsub.f32 %v335, %v338
    %v342 = vsub.f32 %v336, %v340
    %v343 = vmul.f32 %v341, 1.442695
    %v344 = vpow.pop %v343
    %v345 = vmul.f32 %v342, 1.442695
    %v346 = vpow.pop %v345
    %v347 = vsel %vm331, %v344, 0.0
    %v348 = vsel %vm331, %v346, 0.0
    %349 = vadd.xlane.f32.xlu0 %v347
    %v350 = vpop.xlane.xlu0 %349
    %351 = vadd.xlane.f32.xlu0 %v348
    %v352 = vpop.xlane.xlu0 %351
    %v353 = vlog2.pop %v350
    %v354 = vmul.f32 %v353, 0.6931472
    %v355 = vlog2.pop %v352
    %v356 = vmul.f32 %v355, 0.6931472
    %v357 = vadd.f32 %v338, %v354
    %v358 = vadd.f32 %v340, %v356
    %v359 = vsub.f32 %v327, %v357
    %v360 = vsub.f32 %v328, %v358
    %v361 = vsel %vm334, %v327, 0.0
    %v362 = vsel %vm334, %v328, 0.0
    %v363 = vsel %vm331, %v359, %v361
    %v364 = vsel %vm331, %v360, %v362
    %365 = vst [vmem:[#allocation7] sm:$0xff] %v363
    %366 = vst [vmem:[#allocation7 + $0x8] sm:$0xff] %v364
    // Predicated region
    $region22: #{tpu_custom_call.1} parent=1 // pred_check
      _
    $region23: #{tpu_custom_call.1} parent=1 // pred_check_branch
      %368 = sbr.rel (0) target = $region25
    $region24: #{tpu_custom_call.1} parent=1 // pred_region
      %s370 = ssub.s32 256, 256
      %371 = vsyncadd [#allocation4], %s370
      %s372 = sshll.u32 [#allocation7], 4
      %s373 = int_to_ptr.vmem [resolvable:$true] %s372
      %378 = dma.vmem_to_hbm [thread:$0]  %s373, 256, %s3, [#allocation4], 128, 128, 8
    $region25: #{tpu_custom_call.1} parent=1 // pred_fallthru
      _
    // Predicated region
    $region26: #{tpu_custom_call.1} parent=1 // pred_check
      _
    $region27: #{tpu_custom_call.1} parent=1 // pred_check_branch
      %380 = sbr.rel (0) target = $region29
    $region28: #{tpu_custom_call.1} parent=1 // pred_region
      %381 = dma.done [#allocation4], 256
    $region29: #{tpu_custom_call.1} parent=1 // pred_fallthru
      _
    %382 = vsyncpa [#allocation3], 1
    %383 = vsyncpa [#allocation6], 1
    %384 = vsyncpa [#allocation4], 1

</llo_original>
